<compile_context>
chip_gen: v7x
topology: tpu7x:2x2x1
jax: 0.10.0
libtpu: 0.0.40
codegen_flags: <defaults>
</compile_context>

<pallas_src>
import functools

import jax
import jax.numpy as jnp
from jax.experimental import pallas as pl
from jax.experimental.pallas import tpu as pltpu


def _birnn_kernel(x_ref, wih_ref, whh_ref, b_ref, fcw_ref, fcb_ref,
                  out_ref, fw_ref, bw_ref, *, fn):
    S, B, I = x_ref.shape                     # time-leading input layout
    H = fw_ref.shape[2]

    x = x_ref[...].astype(jnp.float32)        # (S, B, I)
    wih = wih_ref[...]                        # (I, 2H)   [fw | bw]
    whh = whh_ref[...]                        # (2H, 2H)  block-diagonal
    b = b_ref[...]                            # (1, 2H)   [b_fw | b_bw]

    # ---- hoisted input projection: one big MXU pass for both directions ----
    xp = jnp.dot(x.reshape(S * B, I), wih,
                 preferred_element_type=jnp.float32) + b       # (S*B, 2H)
    xp = xp.reshape(S, B, 2 * H)

    # Per-step pre-activation addends (independent of the recurrence, so the
    # scheduler can hide them under the serial matmul+tanh chain).  Forward
    # half consumes time t, backward half consumes time S-1-t.
    addends = [
        jnp.concatenate([xp[t, :, :H], xp[S - 1 - t, :, H:]], axis=-1)
        for t in range(S)
    ]

    # ---- fused bidirectional recurrence: S serial steps instead of 2S ----
    h = jnp.tanh(addends[0])                  # h0 == 0  =>  first dot skipped
    fw_ref[0] = h[:, :H]
    bw_ref[S - 1] = h[:, H:]
    for t in range(1, S):                     # statically unrolled (small S)
        h = jnp.tanh(jnp.dot(h, whh, preferred_element_type=jnp.float32)
                     + addends[t])
        fw_ref[t] = h[:, :H]                  # forward state of time t
        bw_ref[S - 1 - t] = h[:, H:]          # backward state stored at S-1-t

    fw = fw_ref[...]                          # (S, B, H)
    bw = bw_ref[...]                          # (S, B, H)

    # ---- FC head ----
    if out_ref.ndim == 2:
        # output_size == 1: lane reduction on VPU/XLU, lane-dense (B, S) store.
        w_fw = fcw_ref[0:1, :][None]          # (1, 1, H)
        w_bw = fcw_ref[1:2, :][None]          # (1, 1, H)
        red = jnp.sum(fw * w_fw + bw * w_bw, axis=-1) + fcb_ref[...]   # (S, B)
        out = red.T                           # (B, S)
    else:
        # general output_size path (not exercised by the test below)
        O = out_ref.shape[2]
        fcw = fcw_ref[...]                    # (2H, O)
        flat = (jnp.dot(fw.reshape(S * B, H), fcw[:H, :],
                        preferred_element_type=jnp.float32)
                + jnp.dot(bw.reshape(S * B, H), fcw[H:, :],
                          preferred_element_type=jnp.float32)
                + fcb_ref[...])               # (S*B, O)
        out = jnp.transpose(flat.reshape(S, B, O), (1, 0, 2))          # (B,S,O)

    # ---- optional activation, fused in-kernel (static at trace time) ----
    if fn == "relu":
        out = jnp.maximum(out, 0.0)
    elif fn == "tanh":
        out = jnp.tanh(out)
    elif fn == "softmax":
        out = jax.nn.softmax(out, axis=-1)

    out_ref[...] = out.astype(out_ref.dtype)


def birnn1_forward(x, params, fn=None):
    """x: (B, S, I) float32.  params: dict of pre-transposed weights."""
    B, S, _ = x.shape
    H = params["whh_fw_t"].shape[0]
    O = params["fc_w_t"].shape[1]
    B_pad = max(8, ((B + 7) // 8) * 8)        # full sublane tile

    # ---- pack weights for the fused kernel (tiny XLA ops, outside kernel) ----
    wih = jnp.concatenate([params["wih_fw_t"], params["wih_bw_t"]], axis=1)  # (I, 2H)
    whh = jnp.zeros((2 * H, 2 * H), jnp.float32)
    whh = whh.at[:H, :H].set(params["whh_fw_t"])
    whh = whh.at[H:, H:].set(params["whh_bw_t"])                             # block-diag
    b = jnp.concatenate([params["b_fw"], params["b_bw"]], axis=1)            # (1, 2H)
    if O == 1:
        fcw = params["fc_w_t"][:, 0].reshape(2, H)   # row0: fw head, row1: bw head
        fcb = params["fc_b"].reshape(1, 1)
        out_shape = jax.ShapeDtypeStruct((B_pad, S), jnp.float32)
    else:
        fcw = params["fc_w_t"]                       # (2H, O)
        fcb = params["fc_b"]                         # (1, O)
        out_shape = jax.ShapeDtypeStruct((B_pad, S, O), jnp.float32)

    # ---- pad batch (zero rows are independent & discarded), time leading ----
    xpad = jnp.pad(x, ((0, B_pad - B), (0, 0), (0, 0))) if B_pad != B else x
    xt = jnp.transpose(xpad, (1, 0, 2))              # (S, B_pad, I)

    vmem = pl.BlockSpec(memory_space=pltpu.MemorySpace.VMEM)
    out = pl.pallas_call(
        functools.partial(_birnn_kernel, fn=fn),
        out_shape=out_shape,
        in_specs=[vmem] * 6,
        out_specs=vmem,
        scratch_shapes=[pltpu.VMEM((S, B_pad, H), jnp.float32),   # fw states
                        pltpu.VMEM((S, B_pad, H), jnp.float32)],  # bw states
    )(xt, wih, whh, b, fcw, fcb)

    return out[:B]


def init_params(key, input_size, hidden_size, output_size):
    """Deterministic init matching PyTorch RNNCell/Linear uniform ranges."""
    ks = jax.random.split(key, 10)
    k = 1.0 / jnp.sqrt(hidden_size)
    kf = 1.0 / jnp.sqrt(2 * hidden_size)
    u = lambda kk, shape, s: jax.random.uniform(kk, shape, jnp.float32, -s, s)

    # RNNCell params (PyTorch layout: W_ih (H,I), W_hh (H,H)); stored transposed.
    wih_fw = u(ks[0], (hidden_size, input_size), k)
    whh_fw = u(ks[1], (hidden_size, hidden_size), k)
    b_fw = u(ks[2], (hidden_size,), k) + u(ks[3], (hidden_size,), k)  # b_ih + b_hh
    wih_bw = u(ks[4], (hidden_size, input_size), k)
    whh_bw = u(ks[5], (hidden_size, hidden_size), k)
    b_bw = u(ks[6], (hidden_size,), k) + u(ks[7], (hidden_size,), k)
    fc_w = u(ks[8], (output_size, 2 * hidden_size), kf)
    fc_b = u(ks[9], (output_size,), kf)

    return {
        "wih_fw_t": wih_fw.T, "whh_fw_t": whh_fw.T, "b_fw": b_fw[None, :],
        "wih_bw_t": wih_bw.T, "whh_bw_t": whh_bw.T, "b_bw": b_bw[None, :],
        "fc_w_t": fc_w.T, "fc_b": fc_b[None, :],
    }


def birnn1_reference(x, params):
    """Pure-JAX reference mirroring the PyTorch forward exactly."""
    B, S, _ = x.shape
    H = params["whh_fw_t"].shape[0]
    h = jnp.zeros((B, H), jnp.float32)
    fw = []
    for t in range(S):
        h = jnp.tanh(x[:, t] @ params["wih_fw_t"] + h @ params["whh_fw_t"]
                     + params["b_fw"])
        fw.append(h)
    h = jnp.zeros((B, H), jnp.float32)
    bw = [None] * S
    for t in range(S - 1, -1, -1):
        h = jnp.tanh(x[:, t] @ params["wih_bw_t"] + h @ params["whh_bw_t"]
                     + params["b_bw"])
        bw[t] = h
    hcat = jnp.concatenate([jnp.stack(fw, 1), jnp.stack(bw, 1)], axis=-1)
    out = hcat @ params["fc_w_t"] + params["fc_b"][None]
    return jnp.squeeze(out, axis=-1)


if __name__ == "__main__":
    batch, seq, input_size, hidden_size, output_size = 4, 8, 16, 32, 1

    key = jax.random.PRNGKey(0)
    kx, kp = jax.random.split(key)
    x = jax.random.normal(kx, (batch, seq, input_size), jnp.float32)
    params = init_params(kp, input_size, hidden_size, output_size)

    out = jax.jit(functools.partial(birnn1_forward, fn=None))(x, params)
    out = jax.block_until_ready(out)

    ref = birnn1_reference(x, params)
    assert out.shape == (batch, seq), out.shape
    assert jnp.allclose(out, ref, atol=1e-4, rtol=1e-4), "mismatch vs reference"

    print("KERNEL_OK")
</pallas_src>

<mosaic_0001>
module attributes {stable_mosaic.version = 11 : i64} {
  func.func @_birnn_kernel(%arg0: memref<8x8x16xf32, #tpu.memory_space<vmem>>, %arg1: memref<16x64xf32, #tpu.memory_space<vmem>>, %arg2: memref<64x64xf32, #tpu.memory_space<vmem>>, %arg3: memref<1x64xf32, #tpu.memory_space<vmem>>, %arg4: memref<2x32xf32, #tpu.memory_space<vmem>>, %arg5: memref<1x1xf32, #tpu.memory_space<vmem>>, %arg6: memref<8x8xf32, #tpu.memory_space<vmem>>, %arg7: memref<8x8x32xf32, #tpu.memory_space<vmem>>, %arg8: memref<8x8x32xf32, #tpu.memory_space<vmem>>) attributes {dimension_semantics = [], scalar_prefetch = 0 : i64, scratch_operands = 2 : i64, tpu.core_type = #tpu.core_type<tc>} {
    %c0 = arith.constant 0 : index
    %c0_0 = arith.constant 0 : index
    %c0_1 = arith.constant 0 : index
    %0 = vector.load %arg0[%c0, %c0_0, %c0_1] : memref<8x8x16xf32, #tpu.memory_space<vmem>>, vector<8x8x16xf32>
    %c0_2 = arith.constant 0 : index
    %c0_3 = arith.constant 0 : index
    %1 = vector.load %arg1[%c0_2, %c0_3] : memref<16x64xf32, #tpu.memory_space<vmem>>, vector<16x64xf32>
    %c0_4 = arith.constant 0 : index
    %c0_5 = arith.constant 0 : index
    %2 = vector.load %arg2[%c0_4, %c0_5] : memref<64x64xf32, #tpu.memory_space<vmem>>, vector<64x64xf32>
    %c0_6 = arith.constant 0 : index
    %c0_7 = arith.constant 0 : index
    %3 = vector.load %arg3[%c0_6, %c0_7] : memref<1x64xf32, #tpu.memory_space<vmem>>, vector<1x64xf32>
    %4 = vector.shape_cast %0 : vector<8x8x16xf32> to vector<64x16xf32>
    %cst = arith.constant dense<0.000000e+00> : vector<64x64xf32>
    %5 = tpu.matmul %4, %1, %cst {dimension_numbers = #tpu.dot_dimension_numbers<[1], [0], [0], [1], [0, 0, 1, 1], [], []>} : vector<64x16xf32>, vector<16x64xf32>, vector<64x64xf32> -> vector<64x64xf32>
    %6 = vector.broadcast %3 : vector<1x64xf32> to vector<64x64xf32>
    %7 = arith.addf %5, %6 : vector<64x64xf32>
    %8 = vector.shape_cast %7 : vector<64x64xf32> to vector<8x8x64xf32>
    %9 = vector.extract_strided_slice %8 {offsets = [0, 0, 0], sizes = [1, 8, 32], strides = [1, 1, 1]} : vector<8x8x64xf32> to vector<1x8x32xf32>
    %10 = vector.shape_cast %9 : vector<1x8x32xf32> to vector<8x32xf32>
    %11 = vector.extract_strided_slice %8 {offsets = [7, 0, 32], sizes = [1, 8, 32], strides = [1, 1, 1]} : vector<8x8x64xf32> to vector<1x8x32xf32>
    %12 = vector.shape_cast %11 : vector<1x8x32xf32> to vector<8x32xf32>
    %13 = tpu.concatenate %10, %12 in 1 : vector<8x32xf32>, vector<8x32xf32> -> vector<8x64xf32>
    %14 = vector.extract_strided_slice %8 {offsets = [1, 0, 0], sizes = [1, 8, 32], strides = [1, 1, 1]} : vector<8x8x64xf32> to vector<1x8x32xf32>
    %15 = vector.shape_cast %14 : vector<1x8x32xf32> to vector<8x32xf32>
    %16 = vector.extract_strided_slice %8 {offsets = [6, 0, 32], sizes = [1, 8, 32], strides = [1, 1, 1]} : vector<8x8x64xf32> to vector<1x8x32xf32>
    %17 = vector.shape_cast %16 : vector<1x8x32xf32> to vector<8x32xf32>
    %18 = tpu.concatenate %15, %17 in 1 : vector<8x32xf32>, vector<8x32xf32> -> vector<8x64xf32>
    %19 = vector.extract_strided_slice %8 {offsets = [2, 0, 0], sizes = [1, 8, 32], strides = [1, 1, 1]} : vector<8x8x64xf32> to vector<1x8x32xf32>
    %20 = vector.shape_cast %19 : vector<1x8x32xf32> to vector<8x32xf32>
    %21 = vector.extract_strided_slice %8 {offsets = [5, 0, 32], sizes = [1, 8, 32], strides = [1, 1, 1]} : vector<8x8x64xf32> to vector<1x8x32xf32>
    %22 = vector.shape_cast %21 : vector<1x8x32xf32> to vector<8x32xf32>
    %23 = tpu.concatenate %20, %22 in 1 : vector<8x32xf32>, vector<8x32xf32> -> vector<8x64xf32>
    %24 = vector.extract_strided_slice %8 {offsets = [3, 0, 0], sizes = [1, 8, 32], strides = [1, 1, 1]} : vector<8x8x64xf32> to vector<1x8x32xf32>
    %25 = vector.shape_cast %24 : vector<1x8x32xf32> to vector<8x32xf32>
    %26 = vector.extract_strided_slice %8 {offsets = [4, 0, 32], sizes = [1, 8, 32], strides = [1, 1, 1]} : vector<8x8x64xf32> to vector<1x8x32xf32>
    %27 = vector.shape_cast %26 : vector<1x8x32xf32> to vector<8x32xf32>
    %28 = tpu.concatenate %25, %27 in 1 : vector<8x32xf32>, vector<8x32xf32> -> vector<8x64xf32>
    %29 = vector.extract_strided_slice %8 {offsets = [4, 0, 0], sizes = [1, 8, 32], strides = [1, 1, 1]} : vector<8x8x64xf32> to vector<1x8x32xf32>
    %30 = vector.shape_cast %29 : vector<1x8x32xf32> to vector<8x32xf32>
    %31 = vector.extract_strided_slice %8 {offsets = [3, 0, 32], sizes = [1, 8, 32], strides = [1, 1, 1]} : vector<8x8x64xf32> to vector<1x8x32xf32>
    %32 = vector.shape_cast %31 : vector<1x8x32xf32> to vector<8x32xf32>
    %33 = tpu.concatenate %30, %32 in 1 : vector<8x32xf32>, vector<8x32xf32> -> vector<8x64xf32>
    %34 = vector.extract_strided_slice %8 {offsets = [5, 0, 0], sizes = [1, 8, 32], strides = [1, 1, 1]} : vector<8x8x64xf32> to vector<1x8x32xf32>
    %35 = vector.shape_cast %34 : vector<1x8x32xf32> to vector<8x32xf32>
    %36 = vector.extract_strided_slice %8 {offsets = [2, 0, 32], sizes = [1, 8, 32], strides = [1, 1, 1]} : vector<8x8x64xf32> to vector<1x8x32xf32>
    %37 = vector.shape_cast %36 : vector<1x8x32xf32> to vector<8x32xf32>
    %38 = tpu.concatenate %35, %37 in 1 : vector<8x32xf32>, vector<8x32xf32> -> vector<8x64xf32>
    %39 = vector.extract_strided_slice %8 {offsets = [6, 0, 0], sizes = [1, 8, 32], strides = [1, 1, 1]} : vector<8x8x64xf32> to vector<1x8x32xf32>
    %40 = vector.shape_cast %39 : vector<1x8x32xf32> to vector<8x32xf32>
    %41 = vector.extract_strided_slice %8 {offsets = [1, 0, 32], sizes = [1, 8, 32], strides = [1, 1, 1]} : vector<8x8x64xf32> to vector<1x8x32xf32>
    %42 = vector.shape_cast %41 : vector<1x8x32xf32> to vector<8x32xf32>
    %43 = tpu.concatenate %40, %42 in 1 : vector<8x32xf32>, vector<8x32xf32> -> vector<8x64xf32>
    %44 = vector.extract_strided_slice %8 {offsets = [7, 0, 0], sizes = [1, 8, 32], strides = [1, 1, 1]} : vector<8x8x64xf32> to vector<1x8x32xf32>
    %45 = vector.shape_cast %44 : vector<1x8x32xf32> to vector<8x32xf32>
    %46 = vector.extract_strided_slice %8 {offsets = [0, 0, 32], sizes = [1, 8, 32], strides = [1, 1, 1]} : vector<8x8x64xf32> to vector<1x8x32xf32>
    %47 = vector.shape_cast %46 : vector<1x8x32xf32> to vector<8x32xf32>
    %48 = tpu.concatenate %45, %47 in 1 : vector<8x32xf32>, vector<8x32xf32> -> vector<8x64xf32>
    %49 = math.tanh %13 : vector<8x64xf32>
    %50 = vector.extract_strided_slice %49 {offsets = [0, 0], sizes = [8, 32], strides = [1, 1]} : vector<8x64xf32> to vector<8x32xf32>
    %c0_8 = arith.constant 0 : index
    %c0_9 = arith.constant 0 : index
    %c0_10 = arith.constant 0 : index
    %51 = vector.load %arg7[%c0_8, %c0_9, %c0_10] : memref<8x8x32xf32, #tpu.memory_space<vmem>>, vector<1x8x32xf32>
    %52 = vector.shape_cast %51 : vector<1x8x32xf32> to vector<8x32xf32>
    %53 = vector.shape_cast %50 : vector<8x32xf32> to vector<1x8x32xf32>
    tpu.vector_store %arg7[%c0_8, %c0_9, %c0_10], %53 {strides = array<i32>} : memref<8x8x32xf32, #tpu.memory_space<vmem>>, vector<1x8x32xf32>,
    %54 = vector.extract_strided_slice %49 {offsets = [0, 32], sizes = [8, 32], strides = [1, 1]} : vector<8x64xf32> to vector<8x32xf32>
    %c7 = arith.constant 7 : index
    %c0_11 = arith.constant 0 : index
    %c0_12 = arith.constant 0 : index
    %55 = vector.load %arg8[%c7, %c0_11, %c0_12] : memref<8x8x32xf32, #tpu.memory_space<vmem>>, vector<1x8x32xf32>
    %56 = vector.shape_cast %55 : vector<1x8x32xf32> to vector<8x32xf32>
    %57 = vector.shape_cast %54 : vector<8x32xf32> to vector<1x8x32xf32>
    tpu.vector_store %arg8[%c7, %c0_11, %c0_12], %57 {strides = array<i32>} : memref<8x8x32xf32, #tpu.memory_space<vmem>>, vector<1x8x32xf32>,
    %cst_13 = arith.constant dense<0.000000e+00> : vector<8x64xf32>
    %58 = tpu.matmul %49, %2, %cst_13 {dimension_numbers = #tpu.dot_dimension_numbers<[1], [0], [0], [1], [0, 0, 1, 1], [], []>} : vector<8x64xf32>, vector<64x64xf32>, vector<8x64xf32> -> vector<8x64xf32>
    %59 = arith.addf %58, %18 : vector<8x64xf32>
    %60 = math.tanh %59 : vector<8x64xf32>
    %61 = vector.extract_strided_slice %60 {offsets = [0, 0], sizes = [8, 32], strides = [1, 1]} : vector<8x64xf32> to vector<8x32xf32>
    %c1 = arith.constant 1 : index
    %c0_14 = arith.constant 0 : index
    %c0_15 = arith.constant 0 : index
    %62 = vector.load %arg7[%c1, %c0_14, %c0_15] : memref<8x8x32xf32, #tpu.memory_space<vmem>>, vector<1x8x32xf32>
    %63 = vector.shape_cast %62 : vector<1x8x32xf32> to vector<8x32xf32>
    %64 = vector.shape_cast %61 : vector<8x32xf32> to vector<1x8x32xf32>
    tpu.vector_store %arg7[%c1, %c0_14, %c0_15], %64 {strides = array<i32>} : memref<8x8x32xf32, #tpu.memory_space<vmem>>, vector<1x8x32xf32>,
    %65 = vector.extract_strided_slice %60 {offsets = [0, 32], sizes = [8, 32], strides = [1, 1]} : vector<8x64xf32> to vector<8x32xf32>
    %c6 = arith.constant 6 : index
    %c0_16 = arith.constant 0 : index
    %c0_17 = arith.constant 0 : index
    %66 = vector.load %arg8[%c6, %c0_16, %c0_17] : memref<8x8x32xf32, #tpu.memory_space<vmem>>, vector<1x8x32xf32>
    %67 = vector.shape_cast %66 : vector<1x8x32xf32> to vector<8x32xf32>
    %68 = vector.shape_cast %65 : vector<8x32xf32> to vector<1x8x32xf32>
    tpu.vector_store %arg8[%c6, %c0_16, %c0_17], %68 {strides = array<i32>} : memref<8x8x32xf32, #tpu.memory_space<vmem>>, vector<1x8x32xf32>,
    %cst_18 = arith.constant dense<0.000000e+00> : vector<8x64xf32>
    %69 = tpu.matmul %60, %2, %cst_18 {dimension_numbers = #tpu.dot_dimension_numbers<[1], [0], [0], [1], [0, 0, 1, 1], [], []>} : vector<8x64xf32>, vector<64x64xf32>, vector<8x64xf32> -> vector<8x64xf32>
    %70 = arith.addf %69, %23 : vector<8x64xf32>
    %71 = math.tanh %70 : vector<8x64xf32>
    %72 = vector.extract_strided_slice %71 {offsets = [0, 0], sizes = [8, 32], strides = [1, 1]} : vector<8x64xf32> to vector<8x32xf32>
    %c2 = arith.constant 2 : index
    %c0_19 = arith.constant 0 : index
    %c0_20 = arith.constant 0 : index
    %73 = vector.load %arg7[%c2, %c0_19, %c0_20] : memref<8x8x32xf32, #tpu.memory_space<vmem>>, vector<1x8x32xf32>
    %74 = vector.shape_cast %73 : vector<1x8x32xf32> to vector<8x32xf32>
    %75 = vector.shape_cast %72 : vector<8x32xf32> to vector<1x8x32xf32>
    tpu.vector_store %arg7[%c2, %c0_19, %c0_20], %75 {strides = array<i32>} : memref<8x8x32xf32, #tpu.memory_space<vmem>>, vector<1x8x32xf32>,
    %76 = vector.extract_strided_slice %71 {offsets = [0, 32], sizes = [8, 32], strides = [1, 1]} : vector<8x64xf32> to vector<8x32xf32>
    %c5 = arith.constant 5 : index
    %c0_21 = arith.constant 0 : index
    %c0_22 = arith.constant 0 : index
    %77 = vector.load %arg8[%c5, %c0_21, %c0_22] : memref<8x8x32xf32, #tpu.memory_space<vmem>>, vector<1x8x32xf32>
    %78 = vector.shape_cast %77 : vector<1x8x32xf32> to vector<8x32xf32>
    %79 = vector.shape_cast %76 : vector<8x32xf32> to vector<1x8x32xf32>
    tpu.vector_store %arg8[%c5, %c0_21, %c0_22], %79 {strides = array<i32>} : memref<8x8x32xf32, #tpu.memory_space<vmem>>, vector<1x8x32xf32>,
    %cst_23 = arith.constant dense<0.000000e+00> : vector<8x64xf32>
    %80 = tpu.matmul %71, %2, %cst_23 {dimension_numbers = #tpu.dot_dimension_numbers<[1], [0], [0], [1], [0, 0, 1, 1], [], []>} : vector<8x64xf32>, vector<64x64xf32>, vector<8x64xf32> -> vector<8x64xf32>
    %81 = arith.addf %80, %28 : vector<8x64xf32>
    %82 = math.tanh %81 : vector<8x64xf32>
    %83 = vector.extract_strided_slice %82 {offsets = [0, 0], sizes = [8, 32], strides = [1, 1]} : vector<8x64xf32> to vector<8x32xf32>
    %c3 = arith.constant 3 : index
    %c0_24 = arith.constant 0 : index
    %c0_25 = arith.constant 0 : index
    %84 = vector.load %arg7[%c3, %c0_24, %c0_25] : memref<8x8x32xf32, #tpu.memory_space<vmem>>, vector<1x8x32xf32>
    %85 = vector.shape_cast %84 : vector<1x8x32xf32> to vector<8x32xf32>
    %86 = vector.shape_cast %83 : vector<8x32xf32> to vector<1x8x32xf32>
    tpu.vector_store %arg7[%c3, %c0_24, %c0_25], %86 {strides = array<i32>} : memref<8x8x32xf32, #tpu.memory_space<vmem>>, vector<1x8x32xf32>,
    %87 = vector.extract_strided_slice %82 {offsets = [0, 32], sizes = [8, 32], strides = [1, 1]} : vector<8x64xf32> to vector<8x32xf32>
    %c4 = arith.constant 4 : index
    %c0_26 = arith.constant 0 : index
    %c0_27 = arith.constant 0 : index
    %88 = vector.load %arg8[%c4, %c0_26, %c0_27] : memref<8x8x32xf32, #tpu.memory_space<vmem>>, vector<1x8x32xf32>
    %89 = vector.shape_cast %88 : vector<1x8x32xf32> to vector<8x32xf32>
    %90 = vector.shape_cast %87 : vector<8x32xf32> to vector<1x8x32xf32>
    tpu.vector_store %arg8[%c4, %c0_26, %c0_27], %90 {strides = array<i32>} : memref<8x8x32xf32, #tpu.memory_space<vmem>>, vector<1x8x32xf32>,
    %cst_28 = arith.constant dense<0.000000e+00> : vector<8x64xf32>
    %91 = tpu.matmul %82, %2, %cst_28 {dimension_numbers = #tpu.dot_dimension_numbers<[1], [0], [0], [1], [0, 0, 1, 1], [], []>} : vector<8x64xf32>, vector<64x64xf32>, vector<8x64xf32> -> vector<8x64xf32>
    %92 = arith.addf %91, %33 : vector<8x64xf32>
    %93 = math.tanh %92 : vector<8x64xf32>
    %94 = vector.extract_strided_slice %93 {offsets = [0, 0], sizes = [8, 32], strides = [1, 1]} : vector<8x64xf32> to vector<8x32xf32>
    %c4_29 = arith.constant 4 : index
    %c0_30 = arith.constant 0 : index
    %c0_31 = arith.constant 0 : index
    %95 = vector.load %arg7[%c4_29, %c0_30, %c0_31] : memref<8x8x32xf32, #tpu.memory_space<vmem>>, vector<1x8x32xf32>
    %96 = vector.shape_cast %95 : vector<1x8x32xf32> to vector<8x32xf32>
    %97 = vector.shape_cast %94 : vector<8x32xf32> to vector<1x8x32xf32>
    tpu.vector_store %arg7[%c4_29, %c0_30, %c0_31], %97 {strides = array<i32>} : memref<8x8x32xf32, #tpu.memory_space<vmem>>, vector<1x8x32xf32>,
    %98 = vector.extract_strided_slice %93 {offsets = [0, 32], sizes = [8, 32], strides = [1, 1]} : vector<8x64xf32> to vector<8x32xf32>
    %c3_32 = arith.constant 3 : index
    %c0_33 = arith.constant 0 : index
    %c0_34 = arith.constant 0 : index
    %99 = vector.load %arg8[%c3_32, %c0_33, %c0_34] : memref<8x8x32xf32, #tpu.memory_space<vmem>>, vector<1x8x32xf32>
    %100 = vector.shape_cast %99 : vector<1x8x32xf32> to vector<8x32xf32>
    %101 = vector.shape_cast %98 : vector<8x32xf32> to vector<1x8x32xf32>
    tpu.vector_store %arg8[%c3_32, %c0_33, %c0_34], %101 {strides = array<i32>} : memref<8x8x32xf32, #tpu.memory_space<vmem>>, vector<1x8x32xf32>,
    %cst_35 = arith.constant dense<0.000000e+00> : vector<8x64xf32>
    %102 = tpu.matmul %93, %2, %cst_35 {dimension_numbers = #tpu.dot_dimension_numbers<[1], [0], [0], [1], [0, 0, 1, 1], [], []>} : vector<8x64xf32>, vector<64x64xf32>, vector<8x64xf32> -> vector<8x64xf32>
    %103 = arith.addf %102, %38 : vector<8x64xf32>
    %104 = math.tanh %103 : vector<8x64xf32>
    %105 = vector.extract_strided_slice %104 {offsets = [0, 0], sizes = [8, 32], strides = [1, 1]} : vector<8x64xf32> to vector<8x32xf32>
    %c5_36 = arith.constant 5 : index
    %c0_37 = arith.constant 0 : index
    %c0_38 = arith.constant 0 : index
    %106 = vector.load %arg7[%c5_36, %c0_37, %c0_38] : memref<8x8x32xf32, #tpu.memory_space<vmem>>, vector<1x8x32xf32>
    %107 = vector.shape_cast %106 : vector<1x8x32xf32> to vector<8x32xf32>
    %108 = vector.shape_cast %105 : vector<8x32xf32> to vector<1x8x32xf32>
    tpu.vector_store %arg7[%c5_36, %c0_37, %c0_38], %108 {strides = array<i32>} : memref<8x8x32xf32, #tpu.memory_space<vmem>>, vector<1x8x32xf32>,
    %109 = vector.extract_strided_slice %104 {offsets = [0, 32], sizes = [8, 32], strides = [1, 1]} : vector<8x64xf32> to vector<8x32xf32>
    %c2_39 = arith.constant 2 : index
    %c0_40 = arith.constant 0 : index
    %c0_41 = arith.constant 0 : index
    %110 = vector.load %arg8[%c2_39, %c0_40, %c0_41] : memref<8x8x32xf32, #tpu.memory_space<vmem>>, vector<1x8x32xf32>
    %111 = vector.shape_cast %110 : vector<1x8x32xf32> to vector<8x32xf32>
    %112 = vector.shape_cast %109 : vector<8x32xf32> to vector<1x8x32xf32>
    tpu.vector_store %arg8[%c2_39, %c0_40, %c0_41], %112 {strides = array<i32>} : memref<8x8x32xf32, #tpu.memory_space<vmem>>, vector<1x8x32xf32>,
    %cst_42 = arith.constant dense<0.000000e+00> : vector<8x64xf32>
    %113 = tpu.matmul %104, %2, %cst_42 {dimension_numbers = #tpu.dot_dimension_numbers<[1], [0], [0], [1], [0, 0, 1, 1], [], []>} : vector<8x64xf32>, vector<64x64xf32>, vector<8x64xf32> -> vector<8x64xf32>
    %114 = arith.addf %113, %43 : vector<8x64xf32>
    %115 = math.tanh %114 : vector<8x64xf32>
    %116 = vector.extract_strided_slice %115 {offsets = [0, 0], sizes = [8, 32], strides = [1, 1]} : vector<8x64xf32> to vector<8x32xf32>
    %c6_43 = arith.constant 6 : index
    %c0_44 = arith.constant 0 : index
    %c0_45 = arith.constant 0 : index
    %117 = vector.load %arg7[%c6_43, %c0_44, %c0_45] : memref<8x8x32xf32, #tpu.memory_space<vmem>>, vector<1x8x32xf32>
    %118 = vector.shape_cast %117 : vector<1x8x32xf32> to vector<8x32xf32>
    %119 = vector.shape_cast %116 : vector<8x32xf32> to vector<1x8x32xf32>
    tpu.vector_store %arg7[%c6_43, %c0_44, %c0_45], %119 {strides = array<i32>} : memref<8x8x32xf32, #tpu.memory_space<vmem>>, vector<1x8x32xf32>,
    %120 = vector.extract_strided_slice %115 {offsets = [0, 32], sizes = [8, 32], strides = [1, 1]} : vector<8x64xf32> to vector<8x32xf32>
    %c1_46 = arith.constant 1 : index
    %c0_47 = arith.constant 0 : index
    %c0_48 = arith.constant 0 : index
    %121 = vector.load %arg8[%c1_46, %c0_47, %c0_48] : memref<8x8x32xf32, #tpu.memory_space<vmem>>, vector<1x8x32xf32>
    %122 = vector.shape_cast %121 : vector<1x8x32xf32> to vector<8x32xf32>
    %123 = vector.shape_cast %120 : vector<8x32xf32> to vector<1x8x32xf32>
    tpu.vector_store %arg8[%c1_46, %c0_47, %c0_48], %123 {strides = array<i32>} : memref<8x8x32xf32, #tpu.memory_space<vmem>>, vector<1x8x32xf32>,
    %cst_49 = arith.constant dense<0.000000e+00> : vector<8x64xf32>
    %124 = tpu.matmul %115, %2, %cst_49 {dimension_numbers = #tpu.dot_dimension_numbers<[1], [0], [0], [1], [0, 0, 1, 1], [], []>} : vector<8x64xf32>, vector<64x64xf32>, vector<8x64xf32> -> vector<8x64xf32>
    %125 = arith.addf %124, %48 : vector<8x64xf32>
    %126 = math.tanh %125 : vector<8x64xf32>
    %127 = vector.extract_strided_slice %126 {offsets = [0, 0], sizes = [8, 32], strides = [1, 1]} : vector<8x64xf32> to vector<8x32xf32>
    %c7_50 = arith.constant 7 : index
    %c0_51 = arith.constant 0 : index
    %c0_52 = arith.constant 0 : index
    %128 = vector.load %arg7[%c7_50, %c0_51, %c0_52] : memref<8x8x32xf32, #tpu.memory_space<vmem>>, vector<1x8x32xf32>
    %129 = vector.shape_cast %128 : vector<1x8x32xf32> to vector<8x32xf32>
    %130 = vector.shape_cast %127 : vector<8x32xf32> to vector<1x8x32xf32>
    tpu.vector_store %arg7[%c7_50, %c0_51, %c0_52], %130 {strides = array<i32>} : memref<8x8x32xf32, #tpu.memory_space<vmem>>, vector<1x8x32xf32>,
    %131 = vector.extract_strided_slice %126 {offsets = [0, 32], sizes = [8, 32], strides = [1, 1]} : vector<8x64xf32> to vector<8x32xf32>
    %c0_53 = arith.constant 0 : index
    %c0_54 = arith.constant 0 : index
    %c0_55 = arith.constant 0 : index
    %132 = vector.load %arg8[%c0_53, %c0_54, %c0_55] : memref<8x8x32xf32, #tpu.memory_space<vmem>>, vector<1x8x32xf32>
    %133 = vector.shape_cast %132 : vector<1x8x32xf32> to vector<8x32xf32>
    %134 = vector.shape_cast %131 : vector<8x32xf32> to vector<1x8x32xf32>
    tpu.vector_store %arg8[%c0_53, %c0_54, %c0_55], %134 {strides = array<i32>} : memref<8x8x32xf32, #tpu.memory_space<vmem>>, vector<1x8x32xf32>,
    %c0_56 = arith.constant 0 : index
    %c0_57 = arith.constant 0 : index
    %c0_58 = arith.constant 0 : index
    %135 = vector.load %arg7[%c0_56, %c0_57, %c0_58] : memref<8x8x32xf32, #tpu.memory_space<vmem>>, vector<8x8x32xf32>
    %c0_59 = arith.constant 0 : index
    %c0_60 = arith.constant 0 : index
    %c0_61 = arith.constant 0 : index
    %136 = vector.load %arg8[%c0_59, %c0_60, %c0_61] : memref<8x8x32xf32, #tpu.memory_space<vmem>>, vector<8x8x32xf32>
    %c0_62 = arith.constant 0 : index
    %c0_63 = arith.constant 0 : index
    %137 = vector.load %arg4[%c0_62, %c0_63] : memref<2x32xf32, #tpu.memory_space<vmem>>, vector<1x32xf32>
    %138 = vector.shape_cast %137 : vector<1x32xf32> to vector<1x1x32xf32>
    %c1_64 = arith.constant 1 : index
    %c0_65 = arith.constant 0 : index
    %139 = vector.load %arg4[%c1_64, %c0_65] : memref<2x32xf32, #tpu.memory_space<vmem>>, vector<1x32xf32>
    %140 = vector.shape_cast %139 : vector<1x32xf32> to vector<1x1x32xf32>
    %141 = vector.broadcast %138 : vector<1x1x32xf32> to vector<8x8x32xf32>
    %142 = arith.mulf %135, %141 : vector<8x8x32xf32>
    %143 = vector.broadcast %140 : vector<1x1x32xf32> to vector<8x8x32xf32>
    %144 = arith.mulf %136, %143 : vector<8x8x32xf32>
    %145 = arith.addf %142, %144 : vector<8x8x32xf32>
    %cst_66 = arith.constant dense<0.000000e+00> : vector<8x8xf32>
    %146 = vector.multi_reduction <add>, %145, %cst_66 [2] : vector<8x8x32xf32> to vector<8x8xf32>
    %c0_67 = arith.constant 0 : index
    %c0_68 = arith.constant 0 : index
    %147 = vector.load %arg5[%c0_67, %c0_68] : memref<1x1xf32, #tpu.memory_space<vmem>>, vector<1x1xf32>
    %148 = vector.broadcast %147 : vector<1x1xf32> to vector<8x8xf32>
    %149 = arith.addf %146, %148 : vector<8x8xf32>
    %150 = tpu.transpose %149, [1, 0] : vector<8x8xf32> -> vector<8x8xf32>
    %c0_69 = arith.constant 0 : index
    %c0_70 = arith.constant 0 : index
    %151 = vector.load %arg6[%c0_69, %c0_70] : memref<8x8xf32, #tpu.memory_space<vmem>>, vector<8x8xf32>
    tpu.vector_store %arg6[%c0_69, %c0_70], %150 {strides = array<i32>} : memref<8x8xf32, #tpu.memory_space<vmem>>, vector<8x8xf32>,
    return
  }
}

</mosaic_0001>

<llo_original>
// kernel: squeeze.1
$region0: #{squeeze.1}
  %s0 = inlined_call_operand.vmem [shape: f32[64], index: 0, kind: input, shape index: {}]
  %s1 = inlined_call_operand.vmem [shape: f32[2,32], index: 1, kind: output, shape index: {}]
  $region1: #{squeeze.1} parent=0
    #allocation0 [shape = 'u8[4096]{0}', space=vmem, size = 0x1000, scoped, tag = 'scoped mem for output reshape']
    #allocation1 [shape = 'u8[4096]{0}', space=vmem, size = 0x1000, scoped, tag = 'scoped mem for input reshape']
    %s3 = sshllo.u32 0, 1
    %v4 = vld [vmem:[%s0] sm:%s3]
    %5 = vst [vmem:[#allocation1] sm:%s3] %v4
    %v6 = vld [vmem:[#allocation1] sm:$0x1]
    %vm7 = vcmask 261120
    %8 = vst.msk [vmem:[#allocation0] sm:$0x1] %vm7, %v6
    %v9 = vld [vmem:[#allocation1] sm:$0x1]
    %10 = vrot.lane.b32.xlu0 %v9, 96
    %v11 = vpop.permute.xlu0 %10
    %vm12 = vcmask 261120
    %s13 = scalar_lea.vmem [#allocation0], 1
    %14 = vst.msk [vmem:[%s13] sm:$0x1] %vm12, %v11
    %s16 = sshllo.u32 0, 2
    %v18 = vld [vmem:[#allocation0] sm:%s16]
    %s19 = sshllo.u32 0, 2
    %20 = vst [vmem:[%s1] sm:%s19] %v18

// kernel: birnn1_forward.1
$region0: #{birnn1_forward.1}
  #allocation0 [shape = 'u32[]', space=smem, size = 0x4, offset = 0x4, fixed_abs, tag = 'smem constant byte address 0x4 - core index']
  #allocation1 [shape = 'u32[144,128]{1,0:T(1,128)}', space=vmem, size = 0x12000, scoped, tag = 'internal scratch']
  #allocation2 [shape = 'f32[8,8,32]{2,1,0:T(8,128)}', space=vmem, size = 0x8000, scoped, tag = 'scratch operand']
  #allocation3 [shape = 'f32[8,8,32]{2,1,0:T(8,128)}', space=vmem, size = 0x8000, scoped, tag = 'scratch operand']
  #allocation4 [shape = 'f32[1,1]{1,0:T(1,128)S(1)}', space=vmem, size = 0x200, scoped, tag = 'scoped memory for birnn1_forward.1']
  %s0 = inlined_call_operand.vmem [shape: f32[8,8,16], index: 0, kind: input, shape index: {}]
  %s1 = inlined_call_operand.vmem [shape: f32[16,64], index: 1, kind: input, shape index: {}]
  %s2 = inlined_call_operand.vmem [shape: f32[64,64], index: 2, kind: input, shape index: {}]
  %s3 = inlined_call_operand.vmem [shape: f32[1,64], index: 3, kind: input, shape index: {}]
  %s4 = inlined_call_operand.vmem [shape: f32[2,32], index: 4, kind: input, shape index: {}]
  %s5 = inlined_call_operand.<no memory space> [shape: f32[1,1], index: 5, kind: input, shape index: {}]
  %s6 = inlined_call_operand.vmem [shape: f32[8,8], index: 6, kind: output, shape index: {}]
  %s7 = sld [smem:[#allocation0]]
  $region34: #{birnn1_forward.1} parent=0
    _
  %s9 = ssub.s32 1, %s7
  %s10 = scalar_select 0, %s9, %s7
  %v11 = vstv %s5
  %12 = vst [vmem:[#allocation4] sm:$0x1] %v11
  // Predicated region
  $region2: #{birnn1_forward.1} parent=0 // pred_check
    _
  $region3: #{birnn1_forward.1} parent=0 // pred_check_branch
    %14 = sbr.rel (0) target = $region5
  $region4: #{birnn1_forward.1} parent=0 // pred_region
    _
  $region5: #{birnn1_forward.1} parent=0 // pred_fallthru
    _
  // Predicated region
  $region6: #{birnn1_forward.1} parent=0 // pred_check
    _
  $region7: #{birnn1_forward.1} parent=0 // pred_check_branch
    %16 = sbr.rel (0) target = $region9
  $region8: #{birnn1_forward.1} parent=0 // pred_region
    _
  $region9: #{birnn1_forward.1} parent=0 // pred_fallthru
    _
  // Predicated region
  $region10: #{birnn1_forward.1} parent=0 // pred_check
    _
  $region11: #{birnn1_forward.1} parent=0 // pred_check_branch
    %18 = sbr.rel (0) target = $region13
  $region12: #{birnn1_forward.1} parent=0 // pred_region
    _
  $region13: #{birnn1_forward.1} parent=0 // pred_fallthru
    _
  // Predicated region
  $region14: #{birnn1_forward.1} parent=0 // pred_check
    _
  $region15: #{birnn1_forward.1} parent=0 // pred_check_branch
    %20 = sbr.rel (0) target = $region17
  $region16: #{birnn1_forward.1} parent=0 // pred_region
    _
  $region17: #{birnn1_forward.1} parent=0 // pred_fallthru
    _
  // Predicated region
  $region18: #{birnn1_forward.1} parent=0 // pred_check
    _
  $region19: #{birnn1_forward.1} parent=0 // pred_check_branch
    %22 = sbr.rel (0) target = $region21
  $region20: #{birnn1_forward.1} parent=0 // pred_region
    _
  $region21: #{birnn1_forward.1} parent=0 // pred_fallthru
    _
  // Predicated region
  $region22: #{birnn1_forward.1} parent=0 // pred_check
    _
  $region23: #{birnn1_forward.1} parent=0 // pred_check_branch
    %24 = sbr.rel (0) target = $region25
  $region24: #{birnn1_forward.1} parent=0 // pred_region
    _
  $region25: #{birnn1_forward.1} parent=0 // pred_fallthru
    _
  %v25 = vld [vmem:[%s0] sm:$0xff]
  %v26 = vld [vmem:[%s0 + $0x8] sm:$0xff]
  %v27 = vld [vmem:[%s0 + $0x10] sm:$0xff]
  %v28 = vld [vmem:[%s0 + $0x18] sm:$0xff]
  %v29 = vld [vmem:[%s0 + $0x20] sm:$0xff]
  %v30 = vld [vmem:[%s0 + $0x28] sm:$0xff]
  %v31 = vld [vmem:[%s0 + $0x30] sm:$0xff]
  %v32 = vld [vmem:[%s0 + $0x38] sm:$0xff]
  %v33 = vld [vmem:[%s1] sm:$0xff]
  %v34 = vld [vmem:[%s1 + $0x8] sm:$0xff]
  %v35 = vld [vmem:[%s2] sm:$0xff]
  %v36 = vld [vmem:[%s2 + $0x8] sm:$0xff]
  %v37 = vld [vmem:[%s2 + $0x10] sm:$0xff]
  %v38 = vld [vmem:[%s2 + $0x18] sm:$0xff]
  %v39 = vld [vmem:[%s2 + $0x20] sm:$0xff]
  %v40 = vld [vmem:[%s2 + $0x28] sm:$0xff]
  %v41 = vld [vmem:[%s2 + $0x30] sm:$0xff]
  %v42 = vld [vmem:[%s2 + $0x38] sm:$0xff]
  %v43 = vld [vmem:[%s3] sm:$0x1]
  %v45 = vlaneseq
  %v46 = vshrl.u32 %v45, 7
  %v47 = vsub.s32 0, %v46
  %v48 = vrot.slane %v43, %v47
  %vm50 = vcmask 130048
  %v52 = vsel %vm50, %v25, 0
  %v55 = vsel %vm50, %v26, 0
  %v58 = vsel %vm50, %v27, 0
  %v61 = vsel %vm50, %v28, 0
  %v64 = vsel %vm50, %v29, 0
  %v67 = vsel %vm50, %v30, 0
  %v70 = vsel %vm50, %v31, 0
  %v73 = vsel %vm50, %v32, 0
  %75 = vmatprep.subr.mxu0 0.0
  %76 = vmatpush1.msra.mxu0 %v33
  %77 = vmatprep.subr.mxu0 0.0
  %78 = vmatpush1.msra.mxu0 %v34
  %79 = vmatprep.subr.mxu0 0.0
  %80 = vmatpush1.msra.mxu0 0.0
  %81 = vmatprep.subr.mxu0 0.0
  %82 = vmatpush1.msra.mxu0 0.0
  %83 = vmatprep.subr.mxu0 0.0
  %84 = vmatpush1.msra.mxu0 0.0
  %85 = vmatprep.subr.mxu0 0.0
  %86 = vmatpush1.msra.mxu0 0.0
  %87 = vmatprep.subr.mxu0 0.0
  %88 = vmatpush1.msra.mxu0 0.0
  %89 = vmatprep.subr.mxu0 0.0
  %90 = vmatpush1.msra.mxu0 0.0
  %91 = vmatprep.subr.mxu0 0.0
  %92 = vmatpush1.msra.mxu0 0.0
  %93 = vmatprep.subr.mxu0 0.0
  %94 = vmatpush1.msra.mxu0 0.0
  %95 = vmatprep.subr.mxu0 0.0
  %96 = vmatpush1.msra.mxu0 0.0
  %97 = vmatprep.subr.mxu0 0.0
  %98 = vmatpush1.msra.mxu0 0.0
  %99 = vmatprep.subr.mxu0 0.0
  %100 = vmatpush1.msra.mxu0 0.0
  %101 = vmatprep.subr.mxu0 0.0
  %102 = vmatpush1.msra.mxu0 0.0
  %103 = vmatprep.subr.mxu0 0.0
  %104 = vmatpush1.msra.mxu0 0.0
  %105 = vmatprep.subr.mxu0 0.0
  %106 = vmatpush1.msra.mxu0 0.0
  %107 = vmatprep.subr.mxu0 0.0
  %108 = vmatpush1.msra.mxu0 0.0
  %109 = vmatprep.subr.mxu0 0.0
  %110 = vmatpush1.msra.mxu0 0.0
  %111 = vmatprep.subr.mxu0 0.0
  %112 = vmatpush1.msra.mxu0 0.0
  %113 = vmatprep.subr.mxu0 0.0
  %114 = vmatpush1.msra.mxu0 0.0
  %115 = vmatprep.subr.mxu0 0.0
  %116 = vmatpush1.msra.mxu0 0.0
  %117 = vmatprep.subr.mxu0 0.0
  %118 = vmatpush1.msra.mxu0 0.0
  %119 = vmatprep.subr.mxu0 0.0
  %120 = vmatpush1.msra.mxu0 0.0
  %121 = vmatprep.subr.mxu0 0.0
  %122 = vmatpush1.msra.mxu0 0.0
  %123 = vmatprep.subr.mxu0 0.0
  %124 = vmatpush1.msra.mxu0 0.0
  %125 = vmatprep.subr.mxu0 0.0
  %126 = vmatpush1.msra.mxu0 0.0
  %127 = vmatprep.subr.mxu0 0.0
  %128 = vmatpush1.msra.mxu0 0.0
  %129 = vmatprep.subr.mxu0 0.0
  %130 = vmatpush1.msra.mxu0 0.0
  %131 = vmatprep.subr.mxu0 0.0
  %132 = vmatpush1.msra.mxu0 0.0
  %133 = vmatprep.subr.mxu0 0.0
  %134 = vmatpush1.msra.mxu0 0.0
  %135 = vmatprep.subr.mxu0 0.0
  %136 = vmatpush1.msra.mxu0 0.0
  %137 = vmatprep.subr.mxu0 0.0
  %138 = vmatpush1.msra.mxu0 0.0
  %139 = vmatprep.mubr.f32.mxu0 0.0
  %140 = vmatmul.mubr.f32.gmra.mrb[0].mxu0 %v52
  %v141 = vpop.f32.mrb[0].mxu0
  %v142 = vadd.f32 %v48, %v141
  %v143 = vpop.f32.mrb[0].mxu0
  %144 = vmatprep.mubr.f32.mxu0 0.0
  %145 = vmatmul.mubr.f32.gmra.mrb[0].mxu0 %v55
  %v146 = vpop.f32.mrb[0].mxu0
  %v147 = vadd.f32 %v48, %v146
  %v148 = vpop.f32.mrb[0].mxu0
  %149 = vmatprep.mubr.f32.mxu0 0.0
  %150 = vmatmul.mubr.f32.gmra.mrb[0].mxu0 %v58
  %v151 = vpop.f32.mrb[0].mxu0
  %v152 = vadd.f32 %v48, %v151
  %v153 = vpop.f32.mrb[0].mxu0
  %154 = vmatprep.mubr.f32.mxu0 0.0
  %155 = vmatmul.mubr.f32.gmra.mrb[0].mxu0 %v61
  %v156 = vpop.f32.mrb[0].mxu0
  %v157 = vadd.f32 %v48, %v156
  %v158 = vpop.f32.mrb[0].mxu0
  %159 = vmatprep.mubr.f32.mxu0 0.0
  %160 = vmatmul.mubr.f32.gmra.mrb[0].mxu0 %v64
  %v161 = vpop.f32.mrb[0].mxu0
  %v162 = vadd.f32 %v48, %v161
  %v163 = vpop.f32.mrb[0].mxu0
  %164 = vmatprep.mubr.f32.mxu0 0.0
  %165 = vmatmul.mubr.f32.gmra.mrb[0].mxu0 %v67
  %v166 = vpop.f32.mrb[0].mxu0
  %v167 = vadd.f32 %v48, %v166
  %v168 = vpop.f32.mrb[0].mxu0
  %169 = vmatprep.mubr.f32.mxu0 0.0
  %170 = vmatmul.mubr.f32.gmra.mrb[0].mxu0 %v70
  %v171 = vpop.f32.mrb[0].mxu0
  %v172 = vadd.f32 %v48, %v171
  %v173 = vpop.f32.mrb[0].mxu0
  %174 = vmatprep.mubr.f32.mxu0 0.0
  %175 = vmatmul.mubr.f32.gmra.mrb[0].mxu0 %v73
  %v176 = vpop.f32.mrb[0].mxu0
  %v177 = vadd.f32 %v48, %v176
  %v178 = vpop.f32.mrb[0].mxu0
  %179 = vdwg.mxu0
  %vm180 = vcmask 261120
  %v181 = vsel %vm180, %v142, %v177
  %v182 = vsel %vm180, %v147, %v172
  %v183 = vsel %vm180, %v152, %v167
  %v184 = vsel %vm180, %v157, %v162
  %v185 = vsel %vm180, %v162, %v157
  %v186 = vsel %vm180, %v167, %v152
  %v187 = vsel %vm180, %v172, %v147
  %v188 = vsel %vm180, %v177, %v142
  %v189 = vtanh.pop %v181
  %190 = vst.msk [vmem:[#allocation2] sm:$0xff] %vm180, %v189
  %192 = vrot.lane.b32.xlu0 %v189, 96
  %v193 = vpop.permute.xlu0 %192
  %s195 = scalar_lea.vmem [#allocation3], 56
  %196 = vst.msk [vmem:[%s195] sm:$0xff] %vm180, %v193
  %vm197 = vcmask 523264
  %v198 = vsel %vm197, %v189, 0
  %200 = vmatprep.subr.mxu0 0.0
  %201 = vmatpush1.msra.mxu0 %v35
  %202 = vmatprep.subr.mxu0 0.0
  %203 = vmatpush1.msra.mxu0 %v36
  %204 = vmatprep.subr.mxu0 0.0
  %205 = vmatpush1.msra.mxu0 %v37
  %206 = vmatprep.subr.mxu0 0.0
  %207 = vmatpush1.msra.mxu0 %v38
  %208 = vmatprep.subr.mxu0 0.0
  %209 = vmatpush1.msra.mxu0 %v39
  %210 = vmatprep.subr.mxu0 0.0
  %211 = vmatpush1.msra.mxu0 %v40
  %212 = vmatprep.subr.mxu0 0.0
  %213 = vmatpush1.msra.mxu0 %v41
  %214 = vmatprep.subr.mxu0 0.0
  %215 = vmatpush1.msra.mxu0 %v42
  %216 = vmatprep.subr.mxu0 0.0
  %217 = vmatpush1.msra.mxu0 0.0
  %218 = vmatprep.subr.mxu0 0.0
  %219 = vmatpush1.msra.mxu0 0.0
  %220 = vmatprep.subr.mxu0 0.0
  %221 = vmatpush1.msra.mxu0 0.0
  %222 = vmatprep.subr.mxu0 0.0
  %223 = vmatpush1.msra.mxu0 0.0
  %224 = vmatprep.subr.mxu0 0.0
  %225 = vmatpush1.msra.mxu0 0.0
  %226 = vmatprep.subr.mxu0 0.0
  %227 = vmatpush1.msra.mxu0 0.0
  %228 = vmatprep.subr.mxu0 0.0
  %229 = vmatpush1.msra.mxu0 0.0
  %230 = vmatprep.subr.mxu0 0.0
  %231 = vmatpush1.msra.mxu0 0.0
  %232 = vmatprep.subr.mxu0 0.0
  %233 = vmatpush1.msra.mxu0 0.0
  %234 = vmatprep.subr.mxu0 0.0
  %235 = vmatpush1.msra.mxu0 0.0
  %236 = vmatprep.subr.mxu0 0.0
  %237 = vmatpush1.msra.mxu0 0.0
  %238 = vmatprep.subr.mxu0 0.0
  %239 = vmatpush1.msra.mxu0 0.0
  %240 = vmatprep.subr.mxu0 0.0
  %241 = vmatpush1.msra.mxu0 0.0
  %242 = vmatprep.subr.mxu0 0.0
  %243 = vmatpush1.msra.mxu0 0.0
  %244 = vmatprep.subr.mxu0 0.0
  %245 = vmatpush1.msra.mxu0 0.0
  %246 = vmatprep.subr.mxu0 0.0
  %247 = vmatpush1.msra.mxu0 0.0
  %248 = vmatprep.subr.mxu0 0.0
  %249 = vmatpush1.msra.mxu0 0.0
  %250 = vmatprep.subr.mxu0 0.0
  %251 = vmatpush1.msra.mxu0 0.0
  %252 = vmatprep.subr.mxu0 0.0
  %253 = vmatpush1.msra.mxu0 0.0
  %254 = vmatprep.subr.mxu0 0.0
  %255 = vmatpush1.msra.mxu0 0.0
  %256 = vmatprep.subr.mxu0 0.0
  %257 = vmatpush1.msra.mxu0 0.0
  %258 = vmatprep.subr.mxu0 0.0
  %259 = vmatpush1.msra.mxu0 0.0
  %260 = vmatprep.subr.mxu0 0.0
  %261 = vmatpush1.msra.mxu0 0.0
  %262 = vmatprep.subr.mxu0 0.0
  %263 = vmatpush1.msra.mxu0 0.0
  %264 = vmatprep.mubr.f32.mxu0 0.0
  %265 = vmatmul.mubr.f32.gmra.mrb[0].mxu0 %v198
  %v266 = vpop.f32.mrb[0].mxu0
  %v267 = vadd.f32 %v182, %v266
  %v268 = vpop.f32.mrb[0].mxu0
  %269 = vdwg.mxu0
  %v270 = vtanh.pop %v267
  %s271 = scalar_lea.vmem [#allocation2], 8
  %272 = vst.msk [vmem:[%s271] sm:$0xff] %vm180, %v270
  %274 = vrot.lane.b32.xlu0 %v270, 96
  %v275 = vpop.permute.xlu0 %274
  %s277 = scalar_lea.vmem [#allocation3], 48
  %278 = vst.msk [vmem:[%s277] sm:$0xff] %vm180, %v275
  %v279 = vsel %vm197, %v270, 0
  %281 = vmatprep.subr.mxu0 0.0
  %282 = vmatpush1.msra.mxu0 %v35
  %283 = vmatprep.subr.mxu0 0.0
  %284 = vmatpush1.msra.mxu0 %v36
  %285 = vmatprep.subr.mxu0 0.0
  %286 = vmatpush1.msra.mxu0 %v37
  %287 = vmatprep.subr.mxu0 0.0
  %288 = vmatpush1.msra.mxu0 %v38
  %289 = vmatprep.subr.mxu0 0.0
  %290 = vmatpush1.msra.mxu0 %v39
  %291 = vmatprep.subr.mxu0 0.0
  %292 = vmatpush1.msra.mxu0 %v40
  %293 = vmatprep.subr.mxu0 0.0
  %294 = vmatpush1.msra.mxu0 %v41
  %295 = vmatprep.subr.mxu0 0.0
  %296 = vmatpush1.msra.mxu0 %v42
  %297 = vmatprep.subr.mxu0 0.0
  %298 = vmatpush1.msra.mxu0 0.0
  %299 = vmatprep.subr.mxu0 0.0
  %300 = vmatpush1.msra.mxu0 0.0
  %301 = vmatprep.subr.mxu0 0.0
  %302 = vmatpush1.msra.mxu0 0.0
  %303 = vmatprep.subr.mxu0 0.0
  %304 = vmatpush1.msra.mxu0 0.0
  %305 = vmatprep.subr.mxu0 0.0
  %306 = vmatpush1.msra.mxu0 0.0
  %307 = vmatprep.subr.mxu0 0.0
  %308 = vmatpush1.msra.mxu0 0.0
  %309 = vmatprep.subr.mxu0 0.0
  %310 = vmatpush1.msra.mxu0 0.0
  %311 = vmatprep.subr.mxu0 0.0
  %312 = vmatpush1.msra.mxu0 0.0
  %313 = vmatprep.subr.mxu0 0.0
  %314 = vmatpush1.msra.mxu0 0.0
  %315 = vmatprep.subr.mxu0 0.0
  %316 = vmatpush1.msra.mxu0 0.0
  %317 = vmatprep.subr.mxu0 0.0
  %318 = vmatpush1.msra.mxu0 0.0
  %319 = vmatprep.subr.mxu0 0.0
  %320 = vmatpush1.msra.mxu0 0.0
  %321 = vmatprep.subr.mxu0 0.0
  %322 = vmatpush1.msra.mxu0 0.0
  %323 = vmatprep.subr.mxu0 0.0
  %324 = vmatpush1.msra.mxu0 0.0
  %325 = vmatprep.subr.mxu0 0.0
  %326 = vmatpush1.msra.mxu0 0.0
  %327 = vmatprep.subr.mxu0 0.0
  %328 = vmatpush1.msra.mxu0 0.0
  %329 = vmatprep.subr.mxu0 0.0
  %330 = vmatpush1.msra.mxu0 0.0
  %331 = vmatprep.subr.mxu0 0.0
  %332 = vmatpush1.msra.mxu0 0.0
  %333 = vmatprep.subr.mxu0 0.0
  %334 = vmatpush1.msra.mxu0 0.0
  %335 = vmatprep.subr.mxu0 0.0
  %336 = vmatpush1.msra.mxu0 0.0
  %337 = vmatprep.subr.mxu0 0.0
  %338 = vmatpush1.msra.mxu0 0.0
  %339 = vmatprep.subr.mxu0 0.0
  %340 = vmatpush1.msra.mxu0 0.0
  %341 = vmatprep.subr.mxu0 0.0
  %342 = vmatpush1.msra.mxu0 0.0
  %343 = vmatprep.subr.mxu0 0.0
  %344 = vmatpush1.msra.mxu0 0.0
  %345 = vmatprep.mubr.f32.mxu0 0.0
  %346 = vmatmul.mubr.f32.gmra.mrb[0].mxu0 %v279
  %v347 = vpop.f32.mrb[0].mxu0
  %v348 = vadd.f32 %v183, %v347
  %v349 = vpop.f32.mrb[0].mxu0
  %350 = vdwg.mxu0
  %v351 = vtanh.pop %v348
  %s352 = scalar_lea.vmem [#allocation2], 16
  %353 = vst.msk [vmem:[%s352] sm:$0xff] %vm180, %v351
  %355 = vrot.lane.b32.xlu0 %v351, 96
  %v356 = vpop.permute.xlu0 %355
  %s358 = scalar_lea.vmem [#allocation3], 40
  %359 = vst.msk [vmem:[%s358] sm:$0xff] %vm180, %v356
  %v360 = vsel %vm197, %v351, 0
  %362 = vmatprep.subr.mxu0 0.0
  %363 = vmatpush1.msra.mxu0 %v35
  %364 = vmatprep.subr.mxu0 0.0
  %365 = vmatpush1.msra.mxu0 %v36
  %366 = vmatprep.subr.mxu0 0.0
  %367 = vmatpush1.msra.mxu0 %v37
  %368 = vmatprep.subr.mxu0 0.0
  %369 = vmatpush1.msra.mxu0 %v38
  %370 = vmatprep.subr.mxu0 0.0
  %371 = vmatpush1.msra.mxu0 %v39
  %372 = vmatprep.subr.mxu0 0.0
  %373 = vmatpush1.msra.mxu0 %v40
  %374 = vmatprep.subr.mxu0 0.0
  %375 = vmatpush1.msra.mxu0 %v41
  %376 = vmatprep.subr.mxu0 0.0
  %377 = vmatpush1.msra.mxu0 %v42
  %378 = vmatprep.subr.mxu0 0.0
  %379 = vmatpush1.msra.mxu0 0.0
  %380 = vmatprep.subr.mxu0 0.0
  %381 = vmatpush1.msra.mxu0 0.0
  %382 = vmatprep.subr.mxu0 0.0
  %383 = vmatpush1.msra.mxu0 0.0
  %384 = vmatprep.subr.mxu0 0.0
  %385 = vmatpush1.msra.mxu0 0.0
  %386 = vmatprep.subr.mxu0 0.0
  %387 = vmatpush1.msra.mxu0 0.0
  %388 = vmatprep.subr.mxu0 0.0
  %389 = vmatpush1.msra.mxu0 0.0
  %390 = vmatprep.subr.mxu0 0.0
  %391 = vmatpush1.msra.mxu0 0.0
  %392 = vmatprep.subr.mxu0 0.0
  %393 = vmatpush1.msra.mxu0 0.0
  %394 = vmatprep.subr.mxu0 0.0
  %395 = vmatpush1.msra.mxu0 0.0
  %396 = vmatprep.subr.mxu0 0.0
  %397 = vmatpush1.msra.mxu0 0.0
  %398 = vmatprep.subr.mxu0 0.0
  %399 = vmatpush1.msra.mxu0 0.0
  %400 = vmatprep.subr.mxu0 0.0
  %401 = vmatpush1.msra.mxu0 0.0
  %402 = vmatprep.subr.mxu0 0.0
  %403 = vmatpush1.msra.mxu0 0.0
  %404 = vmatprep.subr.mxu0 0.0
  %405 = vmatpush1.msra.mxu0 0.0
  %406 = vmatprep.subr.mxu0 0.0
  %407 = vmatpush1.msra.mxu0 0.0
  %408 = vmatprep.subr.mxu0 0.0
  %409 = vmatpush1.msra.mxu0 0.0
  %410 = vmatprep.subr.mxu0 0.0
  %411 = vmatpush1.msra.mxu0 0.0
  %412 = vmatprep.subr.mxu0 0.0
  %413 = vmatpush1.msra.mxu0 0.0
  %414 = vmatprep.subr.mxu0 0.0
  %415 = vmatpush1.msra.mxu0 0.0
  %416 = vmatprep.subr.mxu0 0.0
  %417 = vmatpush1.msra.mxu0 0.0
  %418 = vmatprep.subr.mxu0 0.0
  %419 = vmatpush1.msra.mxu0 0.0
  %420 = vmatprep.subr.mxu0 0.0
  %421 = vmatpush1.msra.mxu0 0.0
  %422 = vmatprep.subr.mxu0 0.0
  %423 = vmatpush1.msra.mxu0 0.0
  %424 = vmatprep.subr.mxu0 0.0
  %425 = vmatpush1.msra.mxu0 0.0
  %426 = vmatprep.mubr.f32.mxu0 0.0
  %427 = vmatmul.mubr.f32.gmra.mrb[0].mxu0 %v360
  %v428 = vpop.f32.mrb[0].mxu0
  %v429 = vadd.f32 %v184, %v428
  %v430 = vpop.f32.mrb[0].mxu0
  %431 = vdwg.mxu0
  %v432 = vtanh.pop %v429
  %s433 = scalar_lea.vmem [#allocation2], 24
  %434 = vst.msk [vmem:[%s433] sm:$0xff] %vm180, %v432
  %436 = vrot.lane.b32.xlu0 %v432, 96
  %v437 = vpop.permute.xlu0 %436
  %s439 = scalar_lea.vmem [#allocation3], 32
  %440 = vst.msk [vmem:[%s439] sm:$0xff] %vm180, %v437
  %v441 = vsel %vm197, %v432, 0
  %443 = vmatprep.subr.mxu0 0.0
  %444 = vmatpush1.msra.mxu0 %v35
  %445 = vmatprep.subr.mxu0 0.0
  %446 = vmatpush1.msra.mxu0 %v36
  %447 = vmatprep.subr.mxu0 0.0
  %448 = vmatpush1.msra.mxu0 %v37
  %449 = vmatprep.subr.mxu0 0.0
  %450 = vmatpush1.msra.mxu0 %v38
  %451 = vmatprep.subr.mxu0 0.0
  %452 = vmatpush1.msra.mxu0 %v39
  %453 = vmatprep.subr.mxu0 0.0
  %454 = vmatpush1.msra.mxu0 %v40
  %455 = vmatprep.subr.mxu0 0.0
  %456 = vmatpush1.msra.mxu0 %v41
  %457 = vmatprep.subr.mxu0 0.0
  %458 = vmatpush1.msra.mxu0 %v42
  %459 = vmatprep.subr.mxu0 0.0
  %460 = vmatpush1.msra.mxu0 0.0
  %461 = vmatprep.subr.mxu0 0.0
  %462 = vmatpush1.msra.mxu0 0.0
  %463 = vmatprep.subr.mxu0 0.0
  %464 = vmatpush1.msra.mxu0 0.0
  %465 = vmatprep.subr.mxu0 0.0
  %466 = vmatpush1.msra.mxu0 0.0
  %467 = vmatprep.subr.mxu0 0.0
  %468 = vmatpush1.msra.mxu0 0.0
  %469 = vmatprep.subr.mxu0 0.0
  %470 = vmatpush1.msra.mxu0 0.0
  %471 = vmatprep.subr.mxu0 0.0
  %472 = vmatpush1.msra.mxu0 0.0
  %473 = vmatprep.subr.mxu0 0.0
  %474 = vmatpush1.msra.mxu0 0.0
  %475 = vmatprep.subr.mxu0 0.0
  %476 = vmatpush1.msra.mxu0 0.0
  %477 = vmatprep.subr.mxu0 0.0
  %478 = vmatpush1.msra.mxu0 0.0
  %479 = vmatprep.subr.mxu0 0.0
  %480 = vmatpush1.msra.mxu0 0.0
  %481 = vmatprep.subr.mxu0 0.0
  %482 = vmatpush1.msra.mxu0 0.0
  %483 = vmatprep.subr.mxu0 0.0
  %484 = vmatpush1.msra.mxu0 0.0
  %485 = vmatprep.subr.mxu0 0.0
  %486 = vmatpush1.msra.mxu0 0.0
  %487 = vmatprep.subr.mxu0 0.0
  %488 = vmatpush1.msra.mxu0 0.0
  %489 = vmatprep.subr.mxu0 0.0
  %490 = vmatpush1.msra.mxu0 0.0
  %491 = vmatprep.subr.mxu0 0.0
  %492 = vmatpush1.msra.mxu0 0.0
  %493 = vmatprep.subr.mxu0 0.0
  %494 = vmatpush1.msra.mxu0 0.0
  %495 = vmatprep.subr.mxu0 0.0
  %496 = vmatpush1.msra.mxu0 0.0
  %497 = vmatprep.subr.mxu0 0.0
  %498 = vmatpush1.msra.mxu0 0.0
  %499 = vmatprep.subr.mxu0 0.0
  %500 = vmatpush1.msra.mxu0 0.0
  %501 = vmatprep.subr.mxu0 0.0
  %502 = vmatpush1.msra.mxu0 0.0
  %503 = vmatprep.subr.mxu0 0.0
  %504 = vmatpush1.msra.mxu0 0.0
  %505 = vmatprep.subr.mxu0 0.0
  %506 = vmatpush1.msra.mxu0 0.0
  %507 = vmatprep.mubr.f32.mxu0 0.0
  %508 = vmatmul.mubr.f32.gmra.mrb[0].mxu0 %v441
  %v509 = vpop.f32.mrb[0].mxu0
  %v510 = vadd.f32 %v185, %v509
  %v511 = vpop.f32.mrb[0].mxu0
  %512 = vdwg.mxu0
  %v513 = vtanh.pop %v510
  %s514 = scalar_lea.vmem [#allocation2], 32
  %515 = vst.msk [vmem:[%s514] sm:$0xff] %vm180, %v513
  %517 = vrot.lane.b32.xlu0 %v513, 96
  %v518 = vpop.permute.xlu0 %517
  %s520 = scalar_lea.vmem [#allocation3], 24
  %521 = vst.msk [vmem:[%s520] sm:$0xff] %vm180, %v518
  %v522 = vsel %vm197, %v513, 0
  %524 = vmatprep.subr.mxu0 0.0
  %525 = vmatpush1.msra.mxu0 %v35
  %526 = vmatprep.subr.mxu0 0.0
  %527 = vmatpush1.msra.mxu0 %v36
  %528 = vmatprep.subr.mxu0 0.0
  %529 = vmatpush1.msra.mxu0 %v37
  %530 = vmatprep.subr.mxu0 0.0
  %531 = vmatpush1.msra.mxu0 %v38
  %532 = vmatprep.subr.mxu0 0.0
  %533 = vmatpush1.msra.mxu0 %v39
  %534 = vmatprep.subr.mxu0 0.0
  %535 = vmatpush1.msra.mxu0 %v40
  %536 = vmatprep.subr.mxu0 0.0
  %537 = vmatpush1.msra.mxu0 %v41
  %538 = vmatprep.subr.mxu0 0.0
  %539 = vmatpush1.msra.mxu0 %v42
  %540 = vmatprep.subr.mxu0 0.0
  %541 = vmatpush1.msra.mxu0 0.0
  %542 = vmatprep.subr.mxu0 0.0
  %543 = vmatpush1.msra.mxu0 0.0
  %544 = vmatprep.subr.mxu0 0.0
  %545 = vmatpush1.msra.mxu0 0.0
  %546 = vmatprep.subr.mxu0 0.0
  %547 = vmatpush1.msra.mxu0 0.0
  %548 = vmatprep.subr.mxu0 0.0
  %549 = vmatpush1.msra.mxu0 0.0
  %550 = vmatprep.subr.mxu0 0.0
  %551 = vmatpush1.msra.mxu0 0.0
  %552 = vmatprep.subr.mxu0 0.0
  %553 = vmatpush1.msra.mxu0 0.0
  %554 = vmatprep.subr.mxu0 0.0
  %555 = vmatpush1.msra.mxu0 0.0
  %556 = vmatprep.subr.mxu0 0.0
  %557 = vmatpush1.msra.mxu0 0.0
  %558 = vmatprep.subr.mxu0 0.0
  %559 = vmatpush1.msra.mxu0 0.0
  %560 = vmatprep.subr.mxu0 0.0
  %561 = vmatpush1.msra.mxu0 0.0
  %562 = vmatprep.subr.mxu0 0.0
  %563 = vmatpush1.msra.mxu0 0.0
  %564 = vmatprep.subr.mxu0 0.0
  %565 = vmatpush1.msra.mxu0 0.0
  %566 = vmatprep.subr.mxu0 0.0
  %567 = vmatpush1.msra.mxu0 0.0
  %568 = vmatprep.subr.mxu0 0.0
  %569 = vmatpush1.msra.mxu0 0.0
  %570 = vmatprep.subr.mxu0 0.0
  %571 = vmatpush1.msra.mxu0 0.0
  %572 = vmatprep.subr.mxu0 0.0
  %573 = vmatpush1.msra.mxu0 0.0
  %574 = vmatprep.subr.mxu0 0.0
  %575 = vmatpush1.msra.mxu0 0.0
  %576 = vmatprep.subr.mxu0 0.0
  %577 = vmatpush1.msra.mxu0 0.0
  %578 = vmatprep.subr.mxu0 0.0
  %579 = vmatpush1.msra.mxu0 0.0
  %580 = vmatprep.subr.mxu0 0.0
  %581 = vmatpush1.msra.mxu0 0.0
  %582 = vmatprep.subr.mxu0 0.0
  %583 = vmatpush1.msra.mxu0 0.0
  %584 = vmatprep.subr.mxu0 0.0
  %585 = vmatpush1.msra.mxu0 0.0
  %586 = vmatprep.subr.mxu0 0.0
  %587 = vmatpush1.msra.mxu0 0.0
  %588 = vmatprep.mubr.f32.mxu0 0.0
  %589 = vmatmul.mubr.f32.gmra.mrb[0].mxu0 %v522
  %v590 = vpop.f32.mrb[0].mxu0
  %v591 = vadd.f32 %v186, %v590
  %v592 = vpop.f32.mrb[0].mxu0
  %593 = vdwg.mxu0
  %v594 = vtanh.pop %v591
  %s595 = scalar_lea.vmem [#allocation2], 40
  %596 = vst.msk [vmem:[%s595] sm:$0xff] %vm180, %v594
  %598 = vrot.lane.b32.xlu0 %v594, 96
  %v599 = vpop.permute.xlu0 %598
  %s601 = scalar_lea.vmem [#allocation3], 16
  %602 = vst.msk [vmem:[%s601] sm:$0xff] %vm180, %v599
  %v603 = vsel %vm197, %v594, 0
  %605 = vmatprep.subr.mxu0 0.0
  %606 = vmatpush1.msra.mxu0 %v35
  %607 = vmatprep.subr.mxu0 0.0
  %608 = vmatpush1.msra.mxu0 %v36
  %609 = vmatprep.subr.mxu0 0.0
  %610 = vmatpush1.msra.mxu0 %v37
  %611 = vmatprep.subr.mxu0 0.0
  %612 = vmatpush1.msra.mxu0 %v38
  %613 = vmatprep.subr.mxu0 0.0
  %614 = vmatpush1.msra.mxu0 %v39
  %615 = vmatprep.subr.mxu0 0.0
  %616 = vmatpush1.msra.mxu0 %v40
  %617 = vmatprep.subr.mxu0 0.0
  %618 = vmatpush1.msra.mxu0 %v41
  %619 = vmatprep.subr.mxu0 0.0
  %620 = vmatpush1.msra.mxu0 %v42
  %621 = vmatprep.subr.mxu0 0.0
  %622 = vmatpush1.msra.mxu0 0.0
  %623 = vmatprep.subr.mxu0 0.0
  %624 = vmatpush1.msra.mxu0 0.0
  %625 = vmatprep.subr.mxu0 0.0
  %626 = vmatpush1.msra.mxu0 0.0
  %627 = vmatprep.subr.mxu0 0.0
  %628 = vmatpush1.msra.mxu0 0.0
  %629 = vmatprep.subr.mxu0 0.0
  %630 = vmatpush1.msra.mxu0 0.0
  %631 = vmatprep.subr.mxu0 0.0
  %632 = vmatpush1.msra.mxu0 0.0
  %633 = vmatprep.subr.mxu0 0.0
  %634 = vmatpush1.msra.mxu0 0.0
  %635 = vmatprep.subr.mxu0 0.0
  %636 = vmatpush1.msra.mxu0 0.0
  %637 = vmatprep.subr.mxu0 0.0
  %638 = vmatpush1.msra.mxu0 0.0
  %639 = vmatprep.subr.mxu0 0.0
  %640 = vmatpush1.msra.mxu0 0.0
  %641 = vmatprep.subr.mxu0 0.0
  %642 = vmatpush1.msra.mxu0 0.0
  %643 = vmatprep.subr.mxu0 0.0
  %644 = vmatpush1.msra.mxu0 0.0
  %645 = vmatprep.subr.mxu0 0.0
  %646 = vmatpush1.msra.mxu0 0.0
  %647 = vmatprep.subr.mxu0 0.0
  %648 = vmatpush1.msra.mxu0 0.0
  %649 = vmatprep.subr.mxu0 0.0
  %650 = vmatpush1.msra.mxu0 0.0
  %651 = vmatprep.subr.mxu0 0.0
  %652 = vmatpush1.msra.mxu0 0.0
  %653 = vmatprep.subr.mxu0 0.0
  %654 = vmatpush1.msra.mxu0 0.0
  %655 = vmatprep.subr.mxu0 0.0
  %656 = vmatpush1.msra.mxu0 0.0
  %657 = vmatprep.subr.mxu0 0.0
  %658 = vmatpush1.msra.mxu0 0.0
  %659 = vmatprep.subr.mxu0 0.0
  %660 = vmatpush1.msra.mxu0 0.0
  %661 = vmatprep.subr.mxu0 0.0
  %662 = vmatpush1.msra.mxu0 0.0
  %663 = vmatprep.subr.mxu0 0.0
  %664 = vmatpush1.msra.mxu0 0.0
  %665 = vmatprep.subr.mxu0 0.0
  %666 = vmatpush1.msra.mxu0 0.0
  %667 = vmatprep.subr.mxu0 0.0
  %668 = vmatpush1.msra.mxu0 0.0
  %669 = vmatprep.mubr.f32.mxu0 0.0
  %670 = vmatmul.mubr.f32.gmra.mrb[0].mxu0 %v603
  %v671 = vpop.f32.mrb[0].mxu0
  %v672 = vadd.f32 %v187, %v671
  %v673 = vpop.f32.mrb[0].mxu0
  %674 = vdwg.mxu0
  %v675 = vtanh.pop %v672
  %s676 = scalar_lea.vmem [#allocation2], 48
  %677 = vst.msk [vmem:[%s676] sm:$0xff] %vm180, %v675
  %679 = vrot.lane.b32.xlu0 %v675, 96
  %v680 = vpop.permute.xlu0 %679
  %s682 = scalar_lea.vmem [#allocation3], 8
  %683 = vst.msk [vmem:[%s682] sm:$0xff] %vm180, %v680
  %v684 = vsel %vm197, %v675, 0
  %686 = vmatprep.subr.mxu0 0.0
  %687 = vmatpush1.msra.mxu0 %v35
  %688 = vmatprep.subr.mxu0 0.0
  %689 = vmatpush1.msra.mxu0 %v36
  %690 = vmatprep.subr.mxu0 0.0
  %691 = vmatpush1.msra.mxu0 %v37
  %692 = vmatprep.subr.mxu0 0.0
  %693 = vmatpush1.msra.mxu0 %v38
  %694 = vmatprep.subr.mxu0 0.0
  %695 = vmatpush1.msra.mxu0 %v39
  %696 = vmatprep.subr.mxu0 0.0
  %697 = vmatpush1.msra.mxu0 %v40
  %698 = vmatprep.subr.mxu0 0.0
  %699 = vmatpush1.msra.mxu0 %v41
  %700 = vmatprep.subr.mxu0 0.0
  %701 = vmatpush1.msra.mxu0 %v42
  %702 = vmatprep.subr.mxu0 0.0
  %703 = vmatpush1.msra.mxu0 0.0
  %704 = vmatprep.subr.mxu0 0.0
  %705 = vmatpush1.msra.mxu0 0.0
  %706 = vmatprep.subr.mxu0 0.0
  %707 = vmatpush1.msra.mxu0 0.0
  %708 = vmatprep.subr.mxu0 0.0
  %709 = vmatpush1.msra.mxu0 0.0
  %710 = vmatprep.subr.mxu0 0.0
  %711 = vmatpush1.msra.mxu0 0.0
  %712 = vmatprep.subr.mxu0 0.0
  %713 = vmatpush1.msra.mxu0 0.0
  %714 = vmatprep.subr.mxu0 0.0
  %715 = vmatpush1.msra.mxu0 0.0
  %716 = vmatprep.subr.mxu0 0.0
  %717 = vmatpush1.msra.mxu0 0.0
  %718 = vmatprep.subr.mxu0 0.0
  %719 = vmatpush1.msra.mxu0 0.0
  %720 = vmatprep.subr.mxu0 0.0
  %721 = vmatpush1.msra.mxu0 0.0
  %722 = vmatprep.subr.mxu0 0.0
  %723 = vmatpush1.msra.mxu0 0.0
  %724 = vmatprep.subr.mxu0 0.0
  %725 = vmatpush1.msra.mxu0 0.0
  %726 = vmatprep.subr.mxu0 0.0
  %727 = vmatpush1.msra.mxu0 0.0
  %728 = vmatprep.subr.mxu0 0.0
  %729 = vmatpush1.msra.mxu0 0.0
  %730 = vmatprep.subr.mxu0 0.0
  %731 = vmatpush1.msra.mxu0 0.0
  %732 = vmatprep.subr.mxu0 0.0
  %733 = vmatpush1.msra.mxu0 0.0
  %734 = vmatprep.subr.mxu0 0.0
  %735 = vmatpush1.msra.mxu0 0.0
  %736 = vmatprep.subr.mxu0 0.0
  %737 = vmatpush1.msra.mxu0 0.0
  %738 = vmatprep.subr.mxu0 0.0
  %739 = vmatpush1.msra.mxu0 0.0
  %740 = vmatprep.subr.mxu0 0.0
  %741 = vmatpush1.msra.mxu0 0.0
  %742 = vmatprep.subr.mxu0 0.0
  %743 = vmatpush1.msra.mxu0 0.0
  %744 = vmatprep.subr.mxu0 0.0
  %745 = vmatpush1.msra.mxu0 0.0
  %746 = vmatprep.subr.mxu0 0.0
  %747 = vmatpush1.msra.mxu0 0.0
  %748 = vmatprep.subr.mxu0 0.0
  %749 = vmatpush1.msra.mxu0 0.0
  %750 = vmatprep.mubr.f32.mxu0 0.0
  %751 = vmatmul.mubr.f32.gmra.mrb[0].mxu0 %v684
  %v752 = vpop.f32.mrb[0].mxu0
  %v753 = vadd.f32 %v188, %v752
  %v754 = vpop.f32.mrb[0].mxu0
  %755 = vdwg.mxu0
  %v756 = vtanh.pop %v753
  %s757 = scalar_lea.vmem [#allocation2], 56
  %758 = vst.msk [vmem:[%s757] sm:$0xff] %vm180, %v756
  %760 = vrot.lane.b32.xlu0 %v756, 96
  %v761 = vpop.permute.xlu0 %760
  %763 = vst.msk [vmem:[#allocation3] sm:$0xff] %vm180, %v761
  %v764 = vld [vmem:[#allocation2] sm:$0xff]
  %v765 = vld [vmem:[#allocation2 + $0x8] sm:$0xff]
  %v766 = vld [vmem:[#allocation2 + $0x10] sm:$0xff]
  %v767 = vld [vmem:[#allocation2 + $0x18] sm:$0xff]
  %v768 = vld [vmem:[#allocation2 + $0x20] sm:$0xff]
  %v769 = vld [vmem:[#allocation2 + $0x28] sm:$0xff]
  %v770 = vld [vmem:[#allocation2 + $0x30] sm:$0xff]
  %v771 = vld [vmem:[#allocation2 + $0x38] sm:$0xff]
  %v772 = vld [vmem:[#allocation3] sm:$0xff]
  %v773 = vld [vmem:[#allocation3 + $0x8] sm:$0xff]
  %v774 = vld [vmem:[#allocation3 + $0x10] sm:$0xff]
  %v775 = vld [vmem:[#allocation3 + $0x18] sm:$0xff]
  %v776 = vld [vmem:[#allocation3 + $0x20] sm:$0xff]
  %v777 = vld [vmem:[#allocation3 + $0x28] sm:$0xff]
  %v778 = vld [vmem:[#allocation3 + $0x30] sm:$0xff]
  %v779 = vld [vmem:[#allocation3 + $0x38] sm:$0xff]
  %v780 = vld [vmem:[%s4] sm:$0x1]
  %v781 = vld [vmem:[%s4 + $0x1] sm:$0x1]
  %v782 = vlaneseq
  %v783 = vshrl.u32 %v782, 7
  %v784 = vsub.s32 0, %v783
  %v785 = vrot.slane %v780, %v784
  %v786 = vmul.f32 %v764, %v785
  %v787 = vmul.f32 %v765, %v785
  %v788 = vmul.f32 %v766, %v785
  %v789 = vmul.f32 %v767, %v785
  %v790 = vmul.f32 %v768, %v785
  %v791 = vmul.f32 %v769, %v785
  %v792 = vmul.f32 %v770, %v785
  %v793 = vmul.f32 %v771, %v785
  %v794 = vlaneseq
  %v795 = vshrl.u32 %v794, 7
  %v796 = vsub.s32 0, %v795
  %v797 = vrot.slane %v781, %v796
  %v798 = vmul.f32 %v772, %v797
  %v799 = vmul.f32 %v773, %v797
  %v800 = vmul.f32 %v774, %v797
  %v801 = vmul.f32 %v775, %v797
  %v802 = vmul.f32 %v776, %v797
  %v803 = vmul.f32 %v777, %v797
  %v804 = vmul.f32 %v778, %v797
  %v805 = vmul.f32 %v779, %v797
  %v806 = vadd.f32 %v786, %v798
  %v807 = vadd.f32 %v787, %v799
  %v808 = vadd.f32 %v788, %v800
  %v809 = vadd.f32 %v789, %v801
  %v810 = vadd.f32 %v790, %v802
  %v811 = vadd.f32 %v791, %v803
  %v812 = vadd.f32 %v792, %v804
  %v813 = vadd.f32 %v793, %v805
  %v814 = vsel %vm180, %v806, 0.0
  %815 = vadd.xlane.f32.xlu0 %v814
  %v816 = vpop.xlane.xlu0 %815
  %v817 = vsel %vm180, %v807, 0.0
  %818 = vadd.xlane.f32.xlu0 %v817
  %v819 = vpop.xlane.xlu0 %818
  %v820 = vsel %vm180, %v808, 0.0
  %821 = vadd.xlane.f32.xlu0 %v820
  %v822 = vpop.xlane.xlu0 %821
  %v823 = vsel %vm180, %v809, 0.0
  %824 = vadd.xlane.f32.xlu0 %v823
  %v825 = vpop.xlane.xlu0 %824
  %v826 = vsel %vm180, %v810, 0.0
  %827 = vadd.xlane.f32.xlu0 %v826
  %v828 = vpop.xlane.xlu0 %827
  %v829 = vsel %vm180, %v811, 0.0
  %830 = vadd.xlane.f32.xlu0 %v829
  %v831 = vpop.xlane.xlu0 %830
  %v832 = vsel %vm180, %v812, 0.0
  %833 = vadd.xlane.f32.xlu0 %v832
  %v834 = vpop.xlane.xlu0 %833
  %v835 = vsel %vm180, %v813, 0.0
  %836 = vadd.xlane.f32.xlu0 %v835
  %v837 = vpop.xlane.xlu0 %836
  %v838 = vld [vmem:[#allocation4] sm:$0x1]
  %v840 = vlaneseq
  %v841 = vshrl.u32 %v840, 7
  %v842 = vsub.s32 0, %v841
  %v843 = vrot.slane %v838, %v842
  %844 = vset.pattern.permute.xlu0 0
  %845 = vperm.xlu0 %844, %v843
  %v846 = vpop.permute.xlu0 %845
  %v848 = vadd.f32 %v816, %v846
  %v849 = vadd.f32 %v819, %v846
  %v850 = vadd.f32 %v822, %v846
  %v851 = vadd.f32 %v825, %v846
  %v852 = vadd.f32 %v828, %v846
  %v853 = vadd.f32 %v831, %v846
  %v854 = vadd.f32 %v834, %v846
  %v855 = vadd.f32 %v837, %v846
  %v864 = vlaneseq
  %v865 = vand.u32 %v864, 127
  %v866 = vlaneseq
  %v867 = vshrl.u32 %v866, 7
  %v868 = vsub.s32 %v865, %v867
  %v869 = vrot.slane %v848, %v868
  %v870 = vlaneseq
  %v871 = vshrl.u32 %v870, 7
  %v872 = vsub.s32 %v865, %v871
  %v873 = vrot.slane %v849, %v872
  %v874 = vlaneseq
  %v875 = vshrl.u32 %v874, 7
  %v876 = vsub.s32 %v865, %v875
  %v877 = vrot.slane %v850, %v876
  %v878 = vlaneseq
  %v879 = vshrl.u32 %v878, 7
  %v880 = vsub.s32 %v865, %v879
  %v881 = vrot.slane %v851, %v880
  %v882 = vlaneseq
  %v883 = vshrl.u32 %v882, 7
  %v884 = vsub.s32 %v865, %v883
  %v885 = vrot.slane %v852, %v884
  %v886 = vlaneseq
  %v887 = vshrl.u32 %v886, 7
  %v888 = vsub.s32 %v865, %v887
  %v889 = vrot.slane %v853, %v888
  %v890 = vlaneseq
  %v891 = vshrl.u32 %v890, 7
  %v892 = vsub.s32 %v865, %v891
  %v893 = vrot.slane %v854, %v892
  %v894 = vlaneseq
  %v895 = vshrl.u32 %v894, 7
  %v896 = vsub.s32 %v865, %v895
  %v897 = vrot.slane %v855, %v896
  %vm898 = vcmask 1041409
  %v899 = vsel %vm898, %v873, %v869
  %vm900 = vcmask 1042434
  %v901 = vsel %vm900, %v877, %v899
  %vm902 = vcmask 1043459
  %v903 = vsel %vm902, %v881, %v901
  %vm904 = vcmask 1044484
  %v905 = vsel %vm904, %v885, %v903
  %vm906 = vcmask 1045509
  %v907 = vsel %vm906, %v889, %v905
  %vm908 = vcmask 1046534
  %v909 = vsel %vm908, %v893, %v907
  %vm910 = vcmask 1047559
  %v911 = vsel %vm910, %v897, %v909
  %913 = vxpose.xlu0.b32.start [1/16] %v911, 128
  %914 = vxpose.xlu0.b32.cont [2/16] 0.0, 128
  %915 = vxpose.xlu0.b32.cont [3/16] 0.0, 128
  %916 = vxpose.xlu0.b32.cont [4/16] 0.0, 128
  %917 = vxpose.xlu0.b32.cont [5/16] 0.0, 128
  %918 = vxpose.xlu0.b32.cont [6/16] 0.0, 128
  %919 = vxpose.xlu0.b32.cont [7/16] 0.0, 128
  %920 = vxpose.xlu0.b32.cont [8/16] 0.0, 128
  %921 = vxpose.xlu0.b32.cont [9/16] 0.0, 128
  %922 = vxpose.xlu0.b32.cont [10/16] 0.0, 128
  %923 = vxpose.xlu0.b32.cont [11/16] 0.0, 128
  %924 = vxpose.xlu0.b32.cont [12/16] 0.0, 128
  %925 = vxpose.xlu0.b32.cont [13/16] 0.0, 128
  %926 = vxpose.xlu0.b32.cont [14/16] 0.0, 128
  %927 = vxpose.xlu0.b32.cont [15/16] 0.0, 128
  %928 = vxpose.xlu0.b32.end [16/16] 0.0, 128
  %v929 = vpop.trf.xlu0
  %v930 = vpop.trf.xlu0
  %v931 = vpop.trf.xlu0
  %v932 = vpop.trf.xlu0
  %v933 = vpop.trf.xlu0
  %v934 = vpop.trf.xlu0
  %v935 = vpop.trf.xlu0
  %v936 = vpop.trf.xlu0
  %v937 = vpop.trf.xlu0
  %v938 = vpop.trf.xlu0
  %v939 = vpop.trf.xlu0
  %v940 = vpop.trf.xlu0
  %v941 = vpop.trf.xlu0
  %v942 = vpop.trf.xlu0
  %v943 = vpop.trf.xlu0
  %v944 = vpop.trf.xlu0
  %vm945 = vcmask 64512
  %946 = vst.msk [vmem:[%s6] sm:$0xff] %vm945, %v929
  // Predicated region
  $region26: #{birnn1_forward.1} parent=0 // pred_check
    _
  $region27: #{birnn1_forward.1} parent=0 // pred_check_branch
    %948 = sbr.rel (0) target = $region29
  $region28: #{birnn1_forward.1} parent=0 // pred_region
    _
  $region29: #{birnn1_forward.1} parent=0 // pred_fallthru
    _
  // Predicated region
  $region30: #{birnn1_forward.1} parent=0 // pred_check
    _
  $region31: #{birnn1_forward.1} parent=0 // pred_check_branch
    %950 = sbr.rel (0) target = $region33
  $region32: #{birnn1_forward.1} parent=0 // pred_region
    _
  $region33: #{birnn1_forward.1} parent=0 // pred_fallthru
    _

</llo_original>
